<compile_context>
chip_gen: v7x
topology: tpu7x:2x2x1
jax: 0.10.0
libtpu: 0.0.40
codegen_flags: <defaults>
</compile_context>

<pallas_src>
import jax
import jax.numpy as jnp
from jax.experimental import pallas as pl
from jax.experimental.pallas import tpu as pltpu


def _sigmoid(x):
    # Exact sigmoid via a single EUP tanh (no divide, no approx reciprocal).
    return 0.5 * (jnp.tanh(0.5 * x) + 1.0)


def _mlp_kernel(x_ref, w1_ref, b1_ref, w2_ref, b2_ref, w3_ref, b3_ref, o_ref):
    # x: (1, TN); w1/b1: (10, 1); w2: (60, 10); b2: (60, 1); w3: (60, 1); b3: (1, 1)
    x = x_ref[...]                                            # (1, TN) lane-dense

    # fc1 (in_features = 1): broadcast multiply-add on the VPU, no MXU.
    h = w1_ref[...] * x + b1_ref[...]                         # (10,1)*(1,TN)+(10,1) -> (10,TN)
    h = _sigmoid(h)

    # fc2: the only matmul worth the MXU. (60, 10) @ (10, TN) -> (60, TN), lane-dense result.
    h = jnp.dot(w2_ref[...], h, preferred_element_type=jnp.float32) + b2_ref[...]
    h = _sigmoid(h)

    # fc3 (out_features = 1): VPU multiply + XLU sublane reduction over the 60 features.
    o = jnp.sum(h * w3_ref[...], axis=0, keepdims=True) + b3_ref[...]   # (1, TN)
    o_ref[...] = o.astype(o_ref.dtype)


def standard_network_forward(x, params, *, tile_n=512):
    """Forward pass of StandardNetwork.

    x: [N] or [N, 1] float32 samples.  Returns [N, 1] float32 (module semantics).
    params layout (kernel-friendly, PyTorch-native [out, in] for w1/w2):
      w1: (10, 1)  b1: (10, 1)
      w2: (60, 10) b2: (60, 1)
      w3: (60, 1)  b3: (1, 1)     (fc3 weight stored as a column)
    """
    assert tile_n % 128 == 0, "tile_n must be a multiple of 128 (lane width)"
    x_flat = x.reshape(-1).astype(jnp.float32)
    n = x_flat.shape[0]
    n_pad = (-n) % tile_n
    n_full = n + n_pad
    # Batch goes on the lane (last) axis; padded lanes are computed and discarded.
    x_row = jnp.pad(x_flat, (0, n_pad)).reshape(1, n_full)

    w1, b1 = params["w1"], params["b1"]
    w2, b2 = params["w2"], params["b2"]
    w3, b3 = params["w3"], params["b3"]

    const = lambda a: pl.BlockSpec(a.shape, lambda i: (0, 0))  # constant index -> no re-DMA per step
    grid = (n_full // tile_n,)

    out_row = pl.pallas_call(
        _mlp_kernel,
        out_shape=jax.ShapeDtypeStruct((1, n_full), jnp.float32),
        grid_spec=pltpu.PrefetchScalarGridSpec(
            num_scalar_prefetch=0,
            grid=grid,
            in_specs=[
                pl.BlockSpec((1, tile_n), lambda i: (0, i)),   # x tile (lane-dense)
                const(w1), const(b1),
                const(w2), const(b2),
                const(w3), const(b3),
            ],
            out_specs=pl.BlockSpec((1, tile_n), lambda i: (0, i)),  # lane-dense output
        ),
        compiler_params=pltpu.CompilerParams(
            dimension_semantics=("parallel",),   # v7x: batch tiles shard across the 2 TCs
        ),
    )(x_row, w1, b1, w2, b2, w3, b3)

    return out_row.reshape(-1)[:n][:, None]


def init_params(key):
    """nn.Linear-style init (U[-1/sqrt(fan_in), +1/sqrt(fan_in)]) in kernel layout."""
    ks = jax.random.split(key, 6)

    def u(k, shape, fan_in):
        bound = 1.0 / jnp.sqrt(float(fan_in))
        return jax.random.uniform(k, shape, jnp.float32, -bound, bound)

    return {
        "w1": u(ks[0], (10, 1), 1),   "b1": u(ks[1], (10, 1), 1),
        "w2": u(ks[2], (60, 10), 10), "b2": u(ks[3], (60, 1), 10),
        "w3": u(ks[4], (60, 1), 60),  "b3": u(ks[5], (1, 1), 60),
    }


def reference_forward(x, p):
    """Pure-JAX reference matching the PyTorch module (x: [N, 1])."""
    h = jax.nn.sigmoid(x @ p["w1"].T + p["b1"].T)    # (N, 10)
    h = jax.nn.sigmoid(h @ p["w2"].T + p["b2"].T)    # (N, 60)
    return h @ p["w3"] + p["b3"].T                   # (N, 1)


if __name__ == "__main__":
    key = jax.random.PRNGKey(0)
    params = init_params(key)

    # Same input as the PyTorch spec: 1000 scalar samples in [-9, 9], shape (1000, 1).
    N = 1000
    x = jnp.linspace(-9.0, 9.0, N, dtype=jnp.float32)[:, None]

    out = standard_network_forward(x, params, tile_n=512)   # 2 parallel grid steps
    out = jax.block_until_ready(out)
    assert out.shape == (N, 1)

    ref = reference_forward(x, params)
    assert jnp.allclose(out, ref, atol=1e-4, rtol=1e-4), "mismatch vs JAX reference"

    print("KERNEL_OK")
</pallas_src>

<mosaic_0001>
module attributes {stable_mosaic.version = 11 : i64} {
  func.func @_mlp_kernel(%arg0: i32, %arg1: memref<1x512xf32, #tpu.memory_space<vmem>>, %arg2: memref<10x1xf32, #tpu.memory_space<vmem>>, %arg3: memref<10x1xf32, #tpu.memory_space<vmem>>, %arg4: memref<60x10xf32, #tpu.memory_space<vmem>>, %arg5: memref<60x1xf32, #tpu.memory_space<vmem>>, %arg6: memref<60x1xf32, #tpu.memory_space<vmem>>, %arg7: memref<1x1xf32, #tpu.memory_space<vmem>>, %arg8: memref<1x512xf32, #tpu.memory_space<vmem>>) attributes {dimension_semantics = [#tpu.dimension_semantics<parallel>], iteration_bounds = array<i64: 2>, scalar_prefetch = 0 : i64, scratch_operands = 0 : i64, tpu.core_type = #tpu.core_type<tc>, window_params = [{transform_indices = @transform_0, window_bounds = array<i64: 1, 512>}, {pipeline_mode = #tpu.pipeline_mode<synchronous>, transform_indices = @transform_1, window_bounds = array<i64: 10, 1>}, {pipeline_mode = #tpu.pipeline_mode<synchronous>, transform_indices = @transform_2, window_bounds = array<i64: 10, 1>}, {pipeline_mode = #tpu.pipeline_mode<synchronous>, transform_indices = @transform_3, window_bounds = array<i64: 60, 10>}, {pipeline_mode = #tpu.pipeline_mode<synchronous>, transform_indices = @transform_4, window_bounds = array<i64: 60, 1>}, {pipeline_mode = #tpu.pipeline_mode<synchronous>, transform_indices = @transform_5, window_bounds = array<i64: 60, 1>}, {pipeline_mode = #tpu.pipeline_mode<synchronous>, transform_indices = @transform_6, window_bounds = array<i64: 1, 1>}, {transform_indices = @transform_7, window_bounds = array<i64: 1, 512>}]} {
    %c0 = arith.constant 0 : index
    %c0_0 = arith.constant 0 : index
    %0 = vector.load %arg1[%c0, %c0_0] : memref<1x512xf32, #tpu.memory_space<vmem>>, vector<1x512xf32>
    %c0_1 = arith.constant 0 : index
    %c0_2 = arith.constant 0 : index
    %1 = vector.load %arg2[%c0_1, %c0_2] : memref<10x1xf32, #tpu.memory_space<vmem>>, vector<10x1xf32>
    %2 = vector.broadcast %1 : vector<10x1xf32> to vector<10x512xf32>
    %3 = vector.broadcast %0 : vector<1x512xf32> to vector<10x512xf32>
    %4 = arith.mulf %2, %3 : vector<10x512xf32>
    %c0_3 = arith.constant 0 : index
    %c0_4 = arith.constant 0 : index
    %5 = vector.load %arg3[%c0_3, %c0_4] : memref<10x1xf32, #tpu.memory_space<vmem>>, vector<10x1xf32>
    %6 = vector.broadcast %5 : vector<10x1xf32> to vector<10x512xf32>
    %7 = arith.addf %4, %6 : vector<10x512xf32>
    %cst = arith.constant 5.000000e-01 : f32
    %8 = vector.broadcast %cst : f32 to vector<10x512xf32>
    %9 = arith.mulf %8, %7 : vector<10x512xf32>
    %10 = math.tanh %9 : vector<10x512xf32>
    %cst_5 = arith.constant 1.000000e+00 : f32
    %11 = vector.broadcast %cst_5 : f32 to vector<10x512xf32>
    %12 = arith.addf %10, %11 : vector<10x512xf32>
    %cst_6 = arith.constant 5.000000e-01 : f32
    %13 = vector.broadcast %cst_6 : f32 to vector<10x512xf32>
    %14 = arith.mulf %13, %12 : vector<10x512xf32>
    %c0_7 = arith.constant 0 : index
    %c0_8 = arith.constant 0 : index
    %15 = vector.load %arg4[%c0_7, %c0_8] : memref<60x10xf32, #tpu.memory_space<vmem>>, vector<60x10xf32>
    %cst_9 = arith.constant dense<0.000000e+00> : vector<60x512xf32>
    %16 = tpu.matmul %15, %14, %cst_9 {dimension_numbers = #tpu.dot_dimension_numbers<[1], [0], [0], [1], [0, 0, 1, 1], [], []>} : vector<60x10xf32>, vector<10x512xf32>, vector<60x512xf32> -> vector<60x512xf32>
    %c0_10 = arith.constant 0 : index
    %c0_11 = arith.constant 0 : index
    %17 = vector.load %arg5[%c0_10, %c0_11] : memref<60x1xf32, #tpu.memory_space<vmem>>, vector<60x1xf32>
    %18 = vector.broadcast %17 : vector<60x1xf32> to vector<60x512xf32>
    %19 = arith.addf %16, %18 : vector<60x512xf32>
    %cst_12 = arith.constant 5.000000e-01 : f32
    %20 = vector.broadcast %cst_12 : f32 to vector<60x512xf32>
    %21 = arith.mulf %20, %19 : vector<60x512xf32>
    %22 = math.tanh %21 : vector<60x512xf32>
    %cst_13 = arith.constant 1.000000e+00 : f32
    %23 = vector.broadcast %cst_13 : f32 to vector<60x512xf32>
    %24 = arith.addf %22, %23 : vector<60x512xf32>
    %cst_14 = arith.constant 5.000000e-01 : f32
    %25 = vector.broadcast %cst_14 : f32 to vector<60x512xf32>
    %26 = arith.mulf %25, %24 : vector<60x512xf32>
    %c0_15 = arith.constant 0 : index
    %c0_16 = arith.constant 0 : index
    %27 = vector.load %arg6[%c0_15, %c0_16] : memref<60x1xf32, #tpu.memory_space<vmem>>, vector<60x1xf32>
    %28 = vector.broadcast %27 : vector<60x1xf32> to vector<60x512xf32>
    %29 = arith.mulf %26, %28 : vector<60x512xf32>
    %cst_17 = arith.constant dense<0.000000e+00> : vector<512xf32>
    %30 = vector.multi_reduction <add>, %29, %cst_17 [0] : vector<60x512xf32> to vector<512xf32>
    %31 = vector.shape_cast %30 : vector<512xf32> to vector<1x512xf32>
    %c0_18 = arith.constant 0 : index
    %c0_19 = arith.constant 0 : index
    %32 = vector.load %arg7[%c0_18, %c0_19] : memref<1x1xf32, #tpu.memory_space<vmem>>, vector<1x1xf32>
    %33 = vector.broadcast %32 : vector<1x1xf32> to vector<1x512xf32>
    %34 = arith.addf %31, %33 : vector<1x512xf32>
    %c0_20 = arith.constant 0 : index
    %c0_21 = arith.constant 0 : index
    %35 = vector.load %arg8[%c0_20, %c0_21] : memref<1x512xf32, #tpu.memory_space<vmem>>, vector<1x512xf32>
    tpu.vector_store %arg8[%c0_20, %c0_21], %34 {strides = array<i32>} : memref<1x512xf32, #tpu.memory_space<vmem>>, vector<1x512xf32>,
    return
  }
  func.func @transform_0(%arg0: i32) -> (i32, i32) {
    %c0_i32 = arith.constant 0 : i32
    %c0_i32_0 = arith.constant 0 : i32
    return %c0_i32, %arg0 : i32, i32
  }
  func.func @transform_1(%arg0: i32) -> (i32, i32) {
    %c0_i32 = arith.constant 0 : i32
    %c0_i32_0 = arith.constant 0 : i32
    %c0_i32_1 = arith.constant 0 : i32
    return %c0_i32, %c0_i32_0 : i32, i32
  }
  func.func @transform_2(%arg0: i32) -> (i32, i32) {
    %c0_i32 = arith.constant 0 : i32
    %c0_i32_0 = arith.constant 0 : i32
    %c0_i32_1 = arith.constant 0 : i32
    return %c0_i32, %c0_i32_0 : i32, i32
  }
  func.func @transform_3(%arg0: i32) -> (i32, i32) {
    %c0_i32 = arith.constant 0 : i32
    %c0_i32_0 = arith.constant 0 : i32
    %c0_i32_1 = arith.constant 0 : i32
    return %c0_i32, %c0_i32_0 : i32, i32
  }
  func.func @transform_4(%arg0: i32) -> (i32, i32) {
    %c0_i32 = arith.constant 0 : i32
    %c0_i32_0 = arith.constant 0 : i32
    %c0_i32_1 = arith.constant 0 : i32
    return %c0_i32, %c0_i32_0 : i32, i32
  }
  func.func @transform_5(%arg0: i32) -> (i32, i32) {
    %c0_i32 = arith.constant 0 : i32
    %c0_i32_0 = arith.constant 0 : i32
    %c0_i32_1 = arith.constant 0 : i32
    return %c0_i32, %c0_i32_0 : i32, i32
  }
  func.func @transform_6(%arg0: i32) -> (i32, i32) {
    %c0_i32 = arith.constant 0 : i32
    %c0_i32_0 = arith.constant 0 : i32
    %c0_i32_1 = arith.constant 0 : i32
    return %c0_i32, %c0_i32_0 : i32, i32
  }
  func.func @transform_7(%arg0: i32) -> (i32, i32) {
    %c0_i32 = arith.constant 0 : i32
    %c0_i32_0 = arith.constant 0 : i32
    return %c0_i32, %arg0 : i32, i32
  }
}

</mosaic_0001>

<llo_original>
// kernel: tpu_custom_call.1
$region0: #{tpu_custom_call.1}
  #allocation0 [shape = 'u32[]', space=smem, size = 0x4, offset = 0x4, fixed_abs, tag = 'smem constant byte address 0x4 - core index']
  #allocation1 [shape = 'u32[144,128]{1,0:T(1,128)}', space=vmem, size = 0x12000, scoped, tag = 'internal scratch']
  #allocation2 [shape = 'f32[1,1]{1,0:T(1,128)S(1)}', space=vmem, size = 0x200, scoped, tag = 'scoped memory for tpu_custom_call.1']
  %s0 = inlined_call_operand.vmem [shape: f32[1,1024], index: 0, kind: input, shape index: {}]
  %s1 = inlined_call_operand.vmem [shape: f32[10,1], index: 1, kind: input, shape index: {}]
  %s2 = inlined_call_operand.vmem [shape: f32[10,1], index: 2, kind: input, shape index: {}]
  %s3 = inlined_call_operand.vmem [shape: f32[60,10], index: 3, kind: input, shape index: {}]
  %s4 = inlined_call_operand.vmem [shape: f32[60,1], index: 4, kind: input, shape index: {}]
  %s5 = inlined_call_operand.vmem [shape: f32[60,1], index: 5, kind: input, shape index: {}]
  %s6 = inlined_call_operand.<no memory space> [shape: f32[1,1], index: 6, kind: input, shape index: {}]
  %s7 = inlined_call_operand.hbm [shape: f32[1,1024], index: 7, kind: output, shape index: {}]
  %s8 = sld [smem:[#allocation0]]
  $region61: #{tpu_custom_call.1} parent=0
    _
  %s10 = ssub.s32 1, %s8
  %s11 = scalar_select 0, %s10, %s8
  %v12 = vstv %s6
  %13 = vst [vmem:[#allocation2] sm:$0x1] %v12
  $region1: #{tpu_custom_call.1} parent=0
    #allocation3 [shape = 'u8[4096]{0}', space=vmem, size = 0x1000, scoped, tag = 'output window, operand 0']
    #allocation4 [shape = 's32[2]{0}', space=sflag, size = 0x8, scoped, tag = 'scoped memory for tpu_custom_call.1']
    %14 = vsyncpa [#allocation4], 0
    %s15 = scalar_lea.sflag [#allocation4], 1
    %16 = vsyncpa %s15, 0
    loop: start=0, step=1, limit=4
    $region2: #{tpu_custom_call.1} parent=1 // loop_pre_header
      _
    $region3: #{tpu_custom_call.1} parent=1 // loop_header
      %s18 = sphi 0, %s22
      %p19 = scmp.ge.s32.totalorder %s18, 4
      %s28 = sphi 0, %s30
      %s31 = sphi 0, %s28
      %s32 = sphi 0, %s31
      %s48 = sphi 0, %s32
      %s52 = sphi 0, %s52
      %s54 = sphi 0, %s52
      %s55 = sphi 0, %s54
      %s69 = sphi 0, %s55
      %s73 = sphi 0, %s73
      %s75 = sphi 0, %s73
      %s76 = sphi 0, %s75
      %s90 = sphi 0, %s76
      %s94 = sphi 0, %s94
      %s96 = sphi 0, %s94
      %s97 = sphi 0, %s96
      %s111 = sphi 0, %s97
      %s115 = sphi 0, %s115
      %s117 = sphi 0, %s115
      %s118 = sphi 0, %s117
      %s132 = sphi 0, %s118
      %s136 = sphi 0, %s136
      %s138 = sphi 0, %s136
      %s139 = sphi 0, %s138
      %s153 = sphi 0, %s139
      %s157 = sphi 0, %s157
      %s159 = sphi 0, %s157
      %s160 = sphi 0, %s159
      %s174 = sphi 0, %s160
      %s180 = sphi 0, %s182
      %s183 = sphi 0, %s180
      %s184 = sphi 0, %s183
      %s200 = sphi 0, %s184
    $region4: #{tpu_custom_call.1} parent=1 // loop_header_branch
      %21 = sbr.rel (%p19) target = $region8
    $region5: #{tpu_custom_call.1} parent=1 // loop_body
      %s23 = ssub.s32 %s18, 1
      %s24 = ssub.s32 %s18, 2
      %s25 = sadd.s32 %s18, 1
      %s26 = ssub.s32 %s18, %s25
      %p27 = scmp.eq.s32.totalorder %s26, 0
      %s29 = sadd.s32 %s28, 1
      %s30 = scalar_select %p27, %s28, %s29
      %p33 = pneg %p27
      %p34 = scmp.eq.s32.totalorder %s18, 1
      %p35 = por %p33, %p34
      %p36 = scmp.ne.s32.totalorder %s28, %s31
      %p37 = scmp.eq.s32.totalorder %s18, 0
      %p38 = por %p36, %p37
      %p39 = scmp.ne.s32.totalorder %s28, %s31
      %p40 = scmp.eq.s32.totalorder %s23, 1
      %p41 = por %p39, %p40
      %p42 = scmp.ne.s32.totalorder %s31, %s32
      %p43 = scmp.eq.s32.totalorder %s23, 0
      %p44 = por %p42, %p43
      %p45 = scmp.ne.s32.totalorder %s31, %s32
      %p46 = scmp.eq.s32.totalorder %s24, 1
      %p47 = por %p45, %p46
      %p49 = scmp.ne.s32.totalorder %s32, %s48
      %p50 = scmp.eq.s32.totalorder %s24, 0
      %p51 = por %p49, %p50
      %s53 = sadd.s32 %s52, 1
      %p56 = scmp.eq.s32.totalorder %s18, 1
      %p57 = scmp.ne.s32.totalorder %s52, %s54
      %p58 = scmp.eq.s32.totalorder %s18, 0
      %p59 = por %p57, %p58
      %p60 = scmp.ne.s32.totalorder %s52, %s54
      %p61 = scmp.eq.s32.totalorder %s23, 1
      %p62 = por %p60, %p61
      %p63 = scmp.ne.s32.totalorder %s54, %s55
      %p64 = scmp.eq.s32.totalorder %s23, 0
      %p65 = por %p63, %p64
      %p66 = scmp.ne.s32.totalorder %s54, %s55
      %p67 = scmp.eq.s32.totalorder %s24, 1
      %p68 = por %p66, %p67
      %p70 = scmp.ne.s32.totalorder %s55, %s69
      %p71 = scmp.eq.s32.totalorder %s24, 0
      %p72 = por %p70, %p71
      %s74 = sadd.s32 %s73, 1
      %p77 = scmp.eq.s32.totalorder %s18, 1
      %p78 = scmp.ne.s32.totalorder %s73, %s75
      %p79 = scmp.eq.s32.totalorder %s18, 0
      %p80 = por %p78, %p79
      %p81 = scmp.ne.s32.totalorder %s73, %s75
      %p82 = scmp.eq.s32.totalorder %s23, 1
      %p83 = por %p81, %p82
      %p84 = scmp.ne.s32.totalorder %s75, %s76
      %p85 = scmp.eq.s32.totalorder %s23, 0
      %p86 = por %p84, %p85
      %p87 = scmp.ne.s32.totalorder %s75, %s76
      %p88 = scmp.eq.s32.totalorder %s24, 1
      %p89 = por %p87, %p88
      %p91 = scmp.ne.s32.totalorder %s76, %s90
      %p92 = scmp.eq.s32.totalorder %s24, 0
      %p93 = por %p91, %p92
      %s95 = sadd.s32 %s94, 1
      %p98 = scmp.eq.s32.totalorder %s18, 1
      %p99 = scmp.ne.s32.totalorder %s94, %s96
      %p100 = scmp.eq.s32.totalorder %s18, 0
      %p101 = por %p99, %p100
      %p102 = scmp.ne.s32.totalorder %s94, %s96
      %p103 = scmp.eq.s32.totalorder %s23, 1
      %p104 = por %p102, %p103
      %p105 = scmp.ne.s32.totalorder %s96, %s97
      %p106 = scmp.eq.s32.totalorder %s23, 0
      %p107 = por %p105, %p106
      %p108 = scmp.ne.s32.totalorder %s96, %s97
      %p109 = scmp.eq.s32.totalorder %s24, 1
      %p110 = por %p108, %p109
      %p112 = scmp.ne.s32.totalorder %s97, %s111
      %p113 = scmp.eq.s32.totalorder %s24, 0
      %p114 = por %p112, %p113
      %s116 = sadd.s32 %s115, 1
      %p119 = scmp.eq.s32.totalorder %s18, 1
      %p120 = scmp.ne.s32.totalorder %s115, %s117
      %p121 = scmp.eq.s32.totalorder %s18, 0
      %p122 = por %p120, %p121
      %p123 = scmp.ne.s32.totalorder %s115, %s117
      %p124 = scmp.eq.s32.totalorder %s23, 1
      %p125 = por %p123, %p124
      %p126 = scmp.ne.s32.totalorder %s117, %s118
      %p127 = scmp.eq.s32.totalorder %s23, 0
      %p128 = por %p126, %p127
      %p129 = scmp.ne.s32.totalorder %s117, %s118
      %p130 = scmp.eq.s32.totalorder %s24, 1
      %p131 = por %p129, %p130
      %p133 = scmp.ne.s32.totalorder %s118, %s132
      %p134 = scmp.eq.s32.totalorder %s24, 0
      %p135 = por %p133, %p134
      %s137 = sadd.s32 %s136, 1
      %p140 = scmp.eq.s32.totalorder %s18, 1
      %p141 = scmp.ne.s32.totalorder %s136, %s138
      %p142 = scmp.eq.s32.totalorder %s18, 0
      %p143 = por %p141, %p142
      %p144 = scmp.ne.s32.totalorder %s136, %s138
      %p145 = scmp.eq.s32.totalorder %s23, 1
      %p146 = por %p144, %p145
      %p147 = scmp.ne.s32.totalorder %s138, %s139
      %p148 = scmp.eq.s32.totalorder %s23, 0
      %p149 = por %p147, %p148
      %p150 = scmp.ne.s32.totalorder %s138, %s139
      %p151 = scmp.eq.s32.totalorder %s24, 1
      %p152 = por %p150, %p151
      %p154 = scmp.ne.s32.totalorder %s139, %s153
      %p155 = scmp.eq.s32.totalorder %s24, 0
      %p156 = por %p154, %p155
      %s158 = sadd.s32 %s157, 1
      %p161 = scmp.eq.s32.totalorder %s18, 1
      %p162 = scmp.ne.s32.totalorder %s157, %s159
      %p163 = scmp.eq.s32.totalorder %s18, 0
      %p164 = por %p162, %p163
      %p165 = scmp.ne.s32.totalorder %s157, %s159
      %p166 = scmp.eq.s32.totalorder %s23, 1
      %p167 = por %p165, %p166
      %p168 = scmp.ne.s32.totalorder %s159, %s160
      %p169 = scmp.eq.s32.totalorder %s23, 0
      %p170 = por %p168, %p169
      %p171 = scmp.ne.s32.totalorder %s159, %s160
      %p172 = scmp.eq.s32.totalorder %s24, 1
      %p173 = por %p171, %p172
      %p175 = scmp.ne.s32.totalorder %s160, %s174
      %p176 = scmp.eq.s32.totalorder %s24, 0
      %p177 = por %p175, %p176
      %s178 = ssub.s32 %s18, %s25
      %p179 = scmp.eq.s32.totalorder %s178, 0
      %s181 = sadd.s32 %s180, 1
      %s182 = scalar_select %p179, %s180, %s181
      %p185 = pneg %p179
      %p186 = scmp.eq.s32.totalorder %s18, 1
      %p187 = por %p185, %p186
      %p188 = scmp.ne.s32.totalorder %s180, %s183
      %p189 = scmp.eq.s32.totalorder %s18, 0
      %p190 = por %p188, %p189
      %p191 = scmp.ne.s32.totalorder %s180, %s183
      %p192 = scmp.eq.s32.totalorder %s23, 1
      %p193 = por %p191, %p192
      %p194 = scmp.ne.s32.totalorder %s183, %s184
      %p195 = scmp.eq.s32.totalorder %s23, 0
      %p196 = por %p194, %p195
      %p197 = scmp.ne.s32.totalorder %s183, %s184
      %p198 = scmp.eq.s32.totalorder %s24, 1
      %p199 = por %p197, %p198
      %p201 = scmp.ne.s32.totalorder %s184, %s200
      %p202 = scmp.eq.s32.totalorder %s24, 0
      %p203 = por %p201, %p202
      %p204 = scmp.le.s32.totalorder 1, %s18
      %p205 = scmp.lt.s32.totalorder %s18, 3
      %p206 = pnand %p204, %p205
      %p207 = pneg %p206
      // Predicated region
      $region9: #{tpu_custom_call.1} parent=5 // pred_check
        _
      $region10: #{tpu_custom_call.1} parent=5 // pred_check_branch
        %209 = sbr.rel (%p206) target = $region12
      $region11: #{tpu_custom_call.1} parent=5 // pred_region
        %s210 = ssub.s32 %s18, 1
        // Predicated region
        $region13: #{tpu_custom_call.1} parent=11 // pred_check
          %p211 = pneg %p65
        $region14: #{tpu_custom_call.1} parent=11 // pred_check_branch
          %213 = sbr.rel (%p211) target = $region16
        $region15: #{tpu_custom_call.1} parent=11 // pred_region
          _
        $region16: #{tpu_custom_call.1} parent=11 // pred_fallthru
          _
        // Predicated region
        $region17: #{tpu_custom_call.1} parent=11 // pred_check
          %p214 = pneg %p86
        $region18: #{tpu_custom_call.1} parent=11 // pred_check_branch
          %216 = sbr.rel (%p214) target = $region20
        $region19: #{tpu_custom_call.1} parent=11 // pred_region
          _
        $region20: #{tpu_custom_call.1} parent=11 // pred_fallthru
          _
        // Predicated region
        $region21: #{tpu_custom_call.1} parent=11 // pred_check
          %p217 = pneg %p107
        $region22: #{tpu_custom_call.1} parent=11 // pred_check_branch
          %219 = sbr.rel (%p217) target = $region24
        $region23: #{tpu_custom_call.1} parent=11 // pred_region
          _
        $region24: #{tpu_custom_call.1} parent=11 // pred_fallthru
          _
        // Predicated region
        $region25: #{tpu_custom_call.1} parent=11 // pred_check
          %p220 = pneg %p128
        $region26: #{tpu_custom_call.1} parent=11 // pred_check_branch
          %222 = sbr.rel (%p220) target = $region28
        $region27: #{tpu_custom_call.1} parent=11 // pred_region
          _
        $region28: #{tpu_custom_call.1} parent=11 // pred_fallthru
          _
        // Predicated region
        $region29: #{tpu_custom_call.1} parent=11 // pred_check
          %p223 = pneg %p149
        $region30: #{tpu_custom_call.1} parent=11 // pred_check_branch
          %225 = sbr.rel (%p223) target = $region32
        $region31: #{tpu_custom_call.1} parent=11 // pred_region
          _
        $region32: #{tpu_custom_call.1} parent=11 // pred_fallthru
          _
        // Predicated region
        $region33: #{tpu_custom_call.1} parent=11 // pred_check
          %p226 = pneg %p170
        $region34: #{tpu_custom_call.1} parent=11 // pred_check_branch
          %228 = sbr.rel (%p226) target = $region36
        $region35: #{tpu_custom_call.1} parent=11 // pred_region
          _
        $region36: #{tpu_custom_call.1} parent=11 // pred_fallthru
          _
      $region12: #{tpu_custom_call.1} parent=5 // pred_fallthru
        _
      %p229 = scmp.lt.s32.totalorder %s18, 2
      // Predicated region
      $region37: #{tpu_custom_call.1} parent=5 // pred_check
        %p230 = pneg %p229
      $region38: #{tpu_custom_call.1} parent=5 // pred_check_branch
        %232 = sbr.rel (%p230) target = $region40
      $region39: #{tpu_custom_call.1} parent=5 // pred_region
        // Predicated region
        $region41: #{tpu_custom_call.1} parent=39 // pred_check
          %p233 = pneg %p38
        $region42: #{tpu_custom_call.1} parent=39 // pred_check_branch
          %235 = sbr.rel (%p233) target = $region44
        $region43: #{tpu_custom_call.1} parent=39 // pred_region
          %s236 = smul.u32 4, %s18
          %p237 = scmp.lt.s32.totalorder %s236, 7
          %s238 = scalar_select %p237, %s236, 7
          %s239 = scalar_lea.vmem %s0, %s238
          %s240 = smul.u32 4, %s18
        $region44: #{tpu_custom_call.1} parent=39 // pred_fallthru
          _
      $region40: #{tpu_custom_call.1} parent=5 // pred_fallthru
        _
      %p241 = scmp.le.s32.totalorder 1, %s18
      %p242 = scmp.lt.s32.totalorder %s18, 3
      %p243 = pnand %p241, %p242
      %p244 = pneg %p243
      // Predicated region
      $region45: #{tpu_custom_call.1} parent=5 // pred_check
        _
      $region46: #{tpu_custom_call.1} parent=5 // pred_check_branch
        %246 = sbr.rel (%p243) target = $region48
      $region47: #{tpu_custom_call.1} parent=5 // pred_region
        %s247 = ssub.s32 %s18, 1
        %s248 = smul.u32 4, %s23
        %p249 = scmp.lt.s32.totalorder %s248, 7
        %s250 = scalar_select %p249, %s248, 7
        %s251 = scalar_lea.vmem %s0, %s250
        %p252 = pneg %p44
        %p253 = pneg %p41
        %p254 = pneg %p65
        %p255 = pneg %p62
        %p256 = pneg %p86
        %p257 = pneg %p83
        %p258 = pneg %p107
        %p259 = pneg %p104
        %p260 = pneg %p128
        %p261 = pneg %p125
        %p262 = pneg %p149
        %p263 = pneg %p146
        %p264 = pneg %p170
        %p265 = pneg %p167
        %p266 = pneg %p196
        %p267 = pneg %p193
        %s268 = sand.u32 %s183, 1
        %s269 = scalar_lea.sflag [#allocation4], %s268
        %s270 = sand.u32 %s183, 1
        %s271 = smul.addr %s270, 4
        %s272 = scalar_lea.vmem [#allocation3], %s271
        %s273 = smul.u32 4, %s23
        %p274 = scmp.lt.s32.totalorder %s273, 7
        %s275 = scalar_select %p274, %s273, 7
        %s276 = scalar_lea.vmem %s0, %s275
        %s277 = smul.u32 4, %s23
        %s278 = smul.u32 4, %s23
        %v279 = vld [vmem:[%s276] sm:$0xf]
        %v280 = vld [vmem:[%s1] sm:$0xff]
        %v281 = vld [vmem:[%s1 + $0x8] sm:$0x3]
        %283 = vset.pattern.permute.xlu0 0
        %284 = vperm.xlu0 %283, %v280
        %v285 = vpop.permute.xlu0 %284
        %288 = vset.pattern.permute.xlu0 0
        %289 = vperm.xlu0 %288, %v281
        %v290 = vpop.permute.xlu0 %289
        %v293 = vlaneseq
        %v294 = vshrl.u32 %v293, 7
        %v295 = vsub.s32 0, %v294
        %v296 = vrot.slane %v279, %v295
        %v297 = vlaneseq
        %v298 = vshrl.u32 %v297, 7
        %v299 = vsub.s32 1, %v298
        %v300 = vrot.slane %v279, %v299
        %v301 = vlaneseq
        %v302 = vshrl.u32 %v301, 7
        %v303 = vsub.s32 2, %v302
        %v304 = vrot.slane %v279, %v303
        %v305 = vlaneseq
        %v306 = vshrl.u32 %v305, 7
        %v307 = vsub.s32 3, %v306
        %v308 = vrot.slane %v279, %v307
        %v313 = vmul.f32 %v285, %v296
        %v314 = vmul.f32 %v285, %v300
        %v315 = vmul.f32 %v285, %v304
        %v316 = vmul.f32 %v285, %v308
        %v317 = vmul.f32 %v290, %v296
        %v318 = vmul.f32 %v290, %v300
        %v319 = vmul.f32 %v290, %v304
        %v320 = vmul.f32 %v290, %v308
        %v321 = vld [vmem:[%s2] sm:$0xff]
        %v322 = vld [vmem:[%s2 + $0x8] sm:$0x3]
        %324 = vset.pattern.permute.xlu0 0
        %325 = vperm.xlu0 %324, %v321
        %v326 = vpop.permute.xlu0 %325
        %329 = vset.pattern.permute.xlu0 0
        %330 = vperm.xlu0 %329, %v322
        %v331 = vpop.permute.xlu0 %330
        %v333 = vadd.f32 %v313, %v326
        %v334 = vadd.f32 %v314, %v326
        %v335 = vadd.f32 %v315, %v326
        %v336 = vadd.f32 %v316, %v326
        %v337 = vadd.f32 %v317, %v331
        %v338 = vadd.f32 %v318, %v331
        %v339 = vadd.f32 %v319, %v331
        %v340 = vadd.f32 %v320, %v331
        %v341 = vmul.f32 %v333, 0.5
        %v342 = vmul.f32 %v334, 0.5
        %v343 = vmul.f32 %v335, 0.5
        %v344 = vmul.f32 %v336, 0.5
        %v345 = vmul.f32 %v337, 0.5
        %v346 = vmul.f32 %v338, 0.5
        %v347 = vmul.f32 %v339, 0.5
        %v348 = vmul.f32 %v340, 0.5
        %v349 = vtanh.pop %v341
        %v350 = vtanh.pop %v342
        %v351 = vtanh.pop %v343
        %v352 = vtanh.pop %v344
        %v353 = vtanh.pop %v345
        %v354 = vtanh.pop %v346
        %v355 = vtanh.pop %v347
        %v356 = vtanh.pop %v348
        %v357 = vadd.f32 %v349, 1.0
        %v358 = vadd.f32 %v350, 1.0
        %v359 = vadd.f32 %v351, 1.0
        %v360 = vadd.f32 %v352, 1.0
        %v361 = vadd.f32 %v353, 1.0
        %v362 = vadd.f32 %v354, 1.0
        %v363 = vadd.f32 %v355, 1.0
        %v364 = vadd.f32 %v356, 1.0
        %v365 = vmul.f32 %v357, 0.5
        %v366 = vmul.f32 %v358, 0.5
        %v367 = vmul.f32 %v359, 0.5
        %v368 = vmul.f32 %v360, 0.5
        %v369 = vmul.f32 %v361, 0.5
        %v370 = vmul.f32 %v362, 0.5
        %v371 = vmul.f32 %v363, 0.5
        %v372 = vmul.f32 %v364, 0.5
        %v373 = vld [vmem:[%s3] sm:$0xff]
        %v374 = vld [vmem:[%s3 + $0x8] sm:$0xff]
        %v375 = vld [vmem:[%s3 + $0x10] sm:$0xff]
        %v376 = vld [vmem:[%s3 + $0x18] sm:$0xff]
        %v377 = vld [vmem:[%s3 + $0x20] sm:$0xff]
        %v378 = vld [vmem:[%s3 + $0x28] sm:$0xff]
        %v379 = vld [vmem:[%s3 + $0x30] sm:$0xff]
        %v380 = vld [vmem:[%s3 + $0x38] sm:$0xf]
        %v381 = vld [vmem:[%s4] sm:$0xff]
        %v382 = vld [vmem:[%s4 + $0x8] sm:$0xff]
        %v383 = vld [vmem:[%s4 + $0x10] sm:$0xff]
        %v384 = vld [vmem:[%s4 + $0x18] sm:$0xff]
        %v385 = vld [vmem:[%s4 + $0x20] sm:$0xff]
        %v386 = vld [vmem:[%s4 + $0x28] sm:$0xff]
        %v387 = vld [vmem:[%s4 + $0x30] sm:$0xff]
        %v388 = vld [vmem:[%s4 + $0x38] sm:$0xf]
        %390 = vset.pattern.permute.xlu0 0
        %391 = vperm.xlu0 %390, %v381
        %v392 = vpop.permute.xlu0 %391
        %395 = vset.pattern.permute.xlu0 0
        %396 = vperm.xlu0 %395, %v382
        %v397 = vpop.permute.xlu0 %396
        %400 = vset.pattern.permute.xlu0 0
        %401 = vperm.xlu0 %400, %v383
        %v402 = vpop.permute.xlu0 %401
        %405 = vset.pattern.permute.xlu0 0
        %406 = vperm.xlu0 %405, %v384
        %v407 = vpop.permute.xlu0 %406
        %410 = vset.pattern.permute.xlu0 0
        %411 = vperm.xlu0 %410, %v385
        %v412 = vpop.permute.xlu0 %411
        %415 = vset.pattern.permute.xlu0 0
        %416 = vperm.xlu0 %415, %v386
        %v417 = vpop.permute.xlu0 %416
        %420 = vset.pattern.permute.xlu0 0
        %421 = vperm.xlu0 %420, %v387
        %v422 = vpop.permute.xlu0 %421
        %425 = vset.pattern.permute.xlu0 0
        %426 = vperm.xlu0 %425, %v388
        %v427 = vpop.permute.xlu0 %426
        %vm429 = vcmask 80896
        %v431 = vsel %vm429, %v373, 0
        %v434 = vsel %vm429, %v374, 0
        %v437 = vsel %vm429, %v375, 0
        %v440 = vsel %vm429, %v376, 0
        %v443 = vsel %vm429, %v377, 0
        %v446 = vsel %vm429, %v378, 0
        %v449 = vsel %vm429, %v379, 0
        %v452 = vsel %vm429, %v380, 0
        %vm454 = vcmask 1041408
        %v456 = vsel %vm454, %v369, 0
        %v459 = vsel %vm454, %v370, 0
        %v462 = vsel %vm454, %v371, 0
        %v465 = vsel %vm454, %v372, 0
        %467 = vmatprep.subr.mxu0 %v366
        %468 = vmatpush1.msra.mxu0 %v365
        %469 = vmatprep.subr.mxu0 %v459
        %470 = vmatpush1.msra.mxu0 %v456
        %471 = vmatprep.subr.mxu0 0.0
        %472 = vmatpush1.msra.mxu0 0.0
        %473 = vmatprep.subr.mxu0 0.0
        %474 = vmatpush1.msra.mxu0 0.0
        %475 = vmatprep.subr.mxu0 0.0
        %476 = vmatpush1.msra.mxu0 0.0
        %477 = vmatprep.subr.mxu0 0.0
        %478 = vmatpush1.msra.mxu0 0.0
        %479 = vmatprep.subr.mxu0 0.0
        %480 = vmatpush1.msra.mxu0 0.0
        %481 = vmatprep.subr.mxu0 0.0
        %482 = vmatpush1.msra.mxu0 0.0
        %483 = vmatprep.subr.mxu0 0.0
        %484 = vmatpush1.msra.mxu0 0.0
        %485 = vmatprep.subr.mxu0 0.0
        %486 = vmatpush1.msra.mxu0 0.0
        %487 = vmatprep.subr.mxu0 0.0
        %488 = vmatpush1.msra.mxu0 0.0
        %489 = vmatprep.subr.mxu0 0.0
        %490 = vmatpush1.msra.mxu0 0.0
        %491 = vmatprep.subr.mxu0 0.0
        %492 = vmatpush1.msra.mxu0 0.0
        %493 = vmatprep.subr.mxu0 0.0
        %494 = vmatpush1.msra.mxu0 0.0
        %495 = vmatprep.subr.mxu0 0.0
        %496 = vmatpush1.msra.mxu0 0.0
        %497 = vmatprep.subr.mxu0 0.0
        %498 = vmatpush1.msra.mxu0 0.0
        %499 = vmatprep.subr.mxu0 0.0
        %500 = vmatpush1.msra.mxu0 0.0
        %501 = vmatprep.subr.mxu0 0.0
        %502 = vmatpush1.msra.mxu0 0.0
        %503 = vmatprep.subr.mxu0 0.0
        %504 = vmatpush1.msra.mxu0 0.0
        %505 = vmatprep.subr.mxu0 0.0
        %506 = vmatpush1.msra.mxu0 0.0
        %507 = vmatprep.subr.mxu0 0.0
        %508 = vmatpush1.msra.mxu0 0.0
        %509 = vmatprep.subr.mxu0 0.0
        %510 = vmatpush1.msra.mxu0 0.0
        %511 = vmatprep.subr.mxu0 0.0
        %512 = vmatpush1.msra.mxu0 0.0
        %513 = vmatprep.subr.mxu0 0.0
        %514 = vmatpush1.msra.mxu0 0.0
        %515 = vmatprep.subr.mxu0 0.0
        %516 = vmatpush1.msra.mxu0 0.0
        %517 = vmatprep.subr.mxu0 0.0
        %518 = vmatpush1.msra.mxu0 0.0
        %519 = vmatprep.subr.mxu0 0.0
        %520 = vmatpush1.msra.mxu0 0.0
        %521 = vmatprep.subr.mxu0 0.0
        %522 = vmatpush1.msra.mxu0 0.0
        %523 = vmatprep.subr.mxu0 0.0
        %524 = vmatpush1.msra.mxu0 0.0
        %525 = vmatprep.subr.mxu0 0.0
        %526 = vmatpush1.msra.mxu0 0.0
        %527 = vmatprep.subr.mxu0 0.0
        %528 = vmatpush1.msra.mxu0 0.0
        %529 = vmatprep.subr.mxu0 0.0
        %530 = vmatpush1.msra.mxu0 0.0
        %531 = vmatprep.mubr.f32.mxu0 0.0
        %532 = vmatmul.mubr.f32.gmra.mrb[0].mxu0 %v431
        %v533 = vpop.f32.mrb[0].mxu0
        %v534 = vadd.f32 %v392, %v533
        %v535 = vpop.f32.mrb[0].mxu0
        %v536 = vadd.f32 %v392, %v535
        %537 = vmatprep.mubr.f32.mxu0 0.0
        %538 = vmatmul.mubr.f32.gmra.mrb[0].mxu0 %v434
        %v539 = vpop.f32.mrb[0].mxu0
        %v540 = vadd.f32 %v397, %v539
        %v541 = vpop.f32.mrb[0].mxu0
        %v542 = vadd.f32 %v397, %v541
        %543 = vmatprep.mubr.f32.mxu0 0.0
        %544 = vmatmul.mubr.f32.gmra.mrb[0].mxu0 %v437
        %v545 = vpop.f32.mrb[0].mxu0
        %v546 = vadd.f32 %v402, %v545
        %v547 = vpop.f32.mrb[0].mxu0
        %v548 = vadd.f32 %v402, %v547
        %549 = vmatprep.mubr.f32.mxu0 0.0
        %550 = vmatmul.mubr.f32.gmra.mrb[0].mxu0 %v440
        %v551 = vpop.f32.mrb[0].mxu0
        %v552 = vadd.f32 %v407, %v551
        %v553 = vpop.f32.mrb[0].mxu0
        %v554 = vadd.f32 %v407, %v553
        %555 = vmatprep.mubr.f32.mxu0 0.0
        %556 = vmatmul.mubr.f32.gmra.mrb[0].mxu0 %v443
        %v557 = vpop.f32.mrb[0].mxu0
        %v558 = vadd.f32 %v412, %v557
        %v559 = vpop.f32.mrb[0].mxu0
        %v560 = vadd.f32 %v412, %v559
        %561 = vmatprep.mubr.f32.mxu0 0.0
        %562 = vmatmul.mubr.f32.gmra.mrb[0].mxu0 %v446
        %v563 = vpop.f32.mrb[0].mxu0
        %v564 = vadd.f32 %v417, %v563
        %v565 = vpop.f32.mrb[0].mxu0
        %v566 = vadd.f32 %v417, %v565
        %567 = vmatprep.mubr.f32.mxu0 0.0
        %568 = vmatmul.mubr.f32.gmra.mrb[0].mxu0 %v449
        %v569 = vpop.f32.mrb[0].mxu0
        %v570 = vadd.f32 %v422, %v569
        %v571 = vpop.f32.mrb[0].mxu0
        %v572 = vadd.f32 %v422, %v571
        %573 = vmatprep.mubr.f32.mxu0 0.0
        %574 = vmatmul.mubr.f32.gmra.mrb[0].mxu0 %v452
        %v575 = vpop.f32.mrb[0].mxu0
        %v576 = vadd.f32 %v427, %v575
        %v577 = vpop.f32.mrb[0].mxu0
        %v578 = vadd.f32 %v427, %v577
        %579 = vdwg.mxu0
        %580 = vmatprep.subr.mxu0 %v368
        %581 = vmatpush1.msra.mxu0 %v367
        %582 = vmatprep.subr.mxu0 %v465
        %583 = vmatpush1.msra.mxu0 %v462
        %584 = vmatprep.subr.mxu0 0.0
        %585 = vmatpush1.msra.mxu0 0.0
        %586 = vmatprep.subr.mxu0 0.0
        %587 = vmatpush1.msra.mxu0 0.0
        %588 = vmatprep.subr.mxu0 0.0
        %589 = vmatpush1.msra.mxu0 0.0
        %590 = vmatprep.subr.mxu0 0.0
        %591 = vmatpush1.msra.mxu0 0.0
        %592 = vmatprep.subr.mxu0 0.0
        %593 = vmatpush1.msra.mxu0 0.0
        %594 = vmatprep.subr.mxu0 0.0
        %595 = vmatpush1.msra.mxu0 0.0
        %596 = vmatprep.subr.mxu0 0.0
        %597 = vmatpush1.msra.mxu0 0.0
        %598 = vmatprep.subr.mxu0 0.0
        %599 = vmatpush1.msra.mxu0 0.0
        %600 = vmatprep.subr.mxu0 0.0
        %601 = vmatpush1.msra.mxu0 0.0
        %602 = vmatprep.subr.mxu0 0.0
        %603 = vmatpush1.msra.mxu0 0.0
        %604 = vmatprep.subr.mxu0 0.0
        %605 = vmatpush1.msra.mxu0 0.0
        %606 = vmatprep.subr.mxu0 0.0
        %607 = vmatpush1.msra.mxu0 0.0
        %608 = vmatprep.subr.mxu0 0.0
        %609 = vmatpush1.msra.mxu0 0.0
        %610 = vmatprep.subr.mxu0 0.0
        %611 = vmatpush1.msra.mxu0 0.0
        %612 = vmatprep.subr.mxu0 0.0
        %613 = vmatpush1.msra.mxu0 0.0
        %614 = vmatprep.subr.mxu0 0.0
        %615 = vmatpush1.msra.mxu0 0.0
        %616 = vmatprep.subr.mxu0 0.0
        %617 = vmatpush1.msra.mxu0 0.0
        %618 = vmatprep.subr.mxu0 0.0
        %619 = vmatpush1.msra.mxu0 0.0
        %620 = vmatprep.subr.mxu0 0.0
        %621 = vmatpush1.msra.mxu0 0.0
        %622 = vmatprep.subr.mxu0 0.0
        %623 = vmatpush1.msra.mxu0 0.0
        %624 = vmatprep.subr.mxu0 0.0
        %625 = vmatpush1.msra.mxu0 0.0
        %626 = vmatprep.subr.mxu0 0.0
        %627 = vmatpush1.msra.mxu0 0.0
        %628 = vmatprep.subr.mxu0 0.0
        %629 = vmatpush1.msra.mxu0 0.0
        %630 = vmatprep.subr.mxu0 0.0
        %631 = vmatpush1.msra.mxu0 0.0
        %632 = vmatprep.subr.mxu0 0.0
        %633 = vmatpush1.msra.mxu0 0.0
        %634 = vmatprep.subr.mxu0 0.0
        %635 = vmatpush1.msra.mxu0 0.0
        %636 = vmatprep.subr.mxu0 0.0
        %637 = vmatpush1.msra.mxu0 0.0
        %638 = vmatprep.subr.mxu0 0.0
        %639 = vmatpush1.msra.mxu0 0.0
        %640 = vmatprep.subr.mxu0 0.0
        %641 = vmatpush1.msra.mxu0 0.0
        %642 = vmatprep.subr.mxu0 0.0
        %643 = vmatpush1.msra.mxu0 0.0
        %644 = vmatprep.mubr.f32.mxu0 0.0
        %645 = vmatmul.mubr.f32.gmra.mrb[0].mxu0 %v431
        %v646 = vpop.f32.mrb[0].mxu0
        %v647 = vadd.f32 %v392, %v646
        %v648 = vpop.f32.mrb[0].mxu0
        %v649 = vadd.f32 %v392, %v648
        %650 = vmatprep.mubr.f32.mxu0 0.0
        %651 = vmatmul.mubr.f32.gmra.mrb[0].mxu0 %v434
        %v652 = vpop.f32.mrb[0].mxu0
        %v653 = vadd.f32 %v397, %v652
        %v654 = vpop.f32.mrb[0].mxu0
        %v655 = vadd.f32 %v397, %v654
        %656 = vmatprep.mubr.f32.mxu0 0.0
        %657 = vmatmul.mubr.f32.gmra.mrb[0].mxu0 %v437
        %v658 = vpop.f32.mrb[0].mxu0
        %v659 = vadd.f32 %v402, %v658
        %v660 = vpop.f32.mrb[0].mxu0
        %v661 = vadd.f32 %v402, %v660
        %662 = vmatprep.mubr.f32.mxu0 0.0
        %663 = vmatmul.mubr.f32.gmra.mrb[0].mxu0 %v440
        %v664 = vpop.f32.mrb[0].mxu0
        %v665 = vadd.f32 %v407, %v664
        %v666 = vpop.f32.mrb[0].mxu0
        %v667 = vadd.f32 %v407, %v666
        %668 = vmatprep.mubr.f32.mxu0 0.0
        %669 = vmatmul.mubr.f32.gmra.mrb[0].mxu0 %v443
        %v670 = vpop.f32.mrb[0].mxu0
        %v671 = vadd.f32 %v412, %v670
        %v672 = vpop.f32.mrb[0].mxu0
        %v673 = vadd.f32 %v412, %v672
        %674 = vmatprep.mubr.f32.mxu0 0.0
        %675 = vmatmul.mubr.f32.gmra.mrb[0].mxu0 %v446
        %v676 = vpop.f32.mrb[0].mxu0
        %v677 = vadd.f32 %v417, %v676
        %v678 = vpop.f32.mrb[0].mxu0
        %v679 = vadd.f32 %v417, %v678
        %680 = vmatprep.mubr.f32.mxu0 0.0
        %681 = vmatmul.mubr.f32.gmra.mrb[0].mxu0 %v449
        %v682 = vpop.f32.mrb[0].mxu0
        %v683 = vadd.f32 %v422, %v682
        %v684 = vpop.f32.mrb[0].mxu0
        %v685 = vadd.f32 %v422, %v684
        %686 = vmatprep.mubr.f32.mxu0 0.0
        %687 = vmatmul.mubr.f32.gmra.mrb[0].mxu0 %v452
        %v688 = vpop.f32.mrb[0].mxu0
        %v689 = vadd.f32 %v427, %v688
        %v690 = vpop.f32.mrb[0].mxu0
        %v691 = vadd.f32 %v427, %v690
        %692 = vdwg.mxu0
        %v693 = vmul.f32 %v534, 0.5
        %v694 = vmul.f32 %v536, 0.5
        %v695 = vmul.f32 %v647, 0.5
        %v696 = vmul.f32 %v649, 0.5
        %v697 = vmul.f32 %v540, 0.5
        %v698 = vmul.f32 %v542, 0.5
        %v699 = vmul.f32 %v653, 0.5
        %v700 = vmul.f32 %v655, 0.5
        %v701 = vmul.f32 %v546, 0.5
        %v702 = vmul.f32 %v548, 0.5
        %v703 = vmul.f32 %v659, 0.5
        %v704 = vmul.f32 %v661, 0.5
        %v705 = vmul.f32 %v552, 0.5
        %v706 = vmul.f32 %v554, 0.5
        %v707 = vmul.f32 %v665, 0.5
        %v708 = vmul.f32 %v667, 0.5
        %v709 = vmul.f32 %v558, 0.5
        %v710 = vmul.f32 %v560, 0.5
        %v711 = vmul.f32 %v671, 0.5
        %v712 = vmul.f32 %v673, 0.5
        %v713 = vmul.f32 %v564, 0.5
        %v714 = vmul.f32 %v566, 0.5
        %v715 = vmul.f32 %v677, 0.5
        %v716 = vmul.f32 %v679, 0.5
        %v717 = vmul.f32 %v570, 0.5
        %v718 = vmul.f32 %v572, 0.5
        %v719 = vmul.f32 %v683, 0.5
        %v720 = vmul.f32 %v685, 0.5
        %v721 = vmul.f32 %v576, 0.5
        %v722 = vmul.f32 %v578, 0.5
        %v723 = vmul.f32 %v689, 0.5
        %v724 = vmul.f32 %v691, 0.5
        %v725 = vtanh.pop %v693
        %v726 = vtanh.pop %v694
        %v727 = vtanh.pop %v695
        %v728 = vtanh.pop %v696
        %v729 = vtanh.pop %v697
        %v730 = vtanh.pop %v698
        %v731 = vtanh.pop %v699
        %v732 = vtanh.pop %v700
        %v733 = vtanh.pop %v701
        %v734 = vtanh.pop %v702
        %v735 = vtanh.pop %v703
        %v736 = vtanh.pop %v704
        %v737 = vtanh.pop %v705
        %v738 = vtanh.pop %v706
        %v739 = vtanh.pop %v707
        %v740 = vtanh.pop %v708
        %v741 = vtanh.pop %v709
        %v742 = vtanh.pop %v710
        %v743 = vtanh.pop %v711
        %v744 = vtanh.pop %v712
        %v745 = vtanh.pop %v713
        %v746 = vtanh.pop %v714
        %v747 = vtanh.pop %v715
        %v748 = vtanh.pop %v716
        %v749 = vtanh.pop %v717
        %v750 = vtanh.pop %v718
        %v751 = vtanh.pop %v719
        %v752 = vtanh.pop %v720
        %v753 = vtanh.pop %v721
        %v754 = vtanh.pop %v722
        %v755 = vtanh.pop %v723
        %v756 = vtanh.pop %v724
        %v757 = vadd.f32 %v725, 1.0
        %v758 = vadd.f32 %v726, 1.0
        %v759 = vadd.f32 %v727, 1.0
        %v760 = vadd.f32 %v728, 1.0
        %v761 = vadd.f32 %v729, 1.0
        %v762 = vadd.f32 %v730, 1.0
        %v763 = vadd.f32 %v731, 1.0
        %v764 = vadd.f32 %v732, 1.0
        %v765 = vadd.f32 %v733, 1.0
        %v766 = vadd.f32 %v734, 1.0
        %v767 = vadd.f32 %v735, 1.0
        %v768 = vadd.f32 %v736, 1.0
        %v769 = vadd.f32 %v737, 1.0
        %v770 = vadd.f32 %v738, 1.0
        %v771 = vadd.f32 %v739, 1.0
        %v772 = vadd.f32 %v740, 1.0
        %v773 = vadd.f32 %v741, 1.0
        %v774 = vadd.f32 %v742, 1.0
        %v775 = vadd.f32 %v743, 1.0
        %v776 = vadd.f32 %v744, 1.0
        %v777 = vadd.f32 %v745, 1.0
        %v778 = vadd.f32 %v746, 1.0
        %v779 = vadd.f32 %v747, 1.0
        %v780 = vadd.f32 %v748, 1.0
        %v781 = vadd.f32 %v749, 1.0
        %v782 = vadd.f32 %v750, 1.0
        %v783 = vadd.f32 %v751, 1.0
        %v784 = vadd.f32 %v752, 1.0
        %v785 = vadd.f32 %v753, 1.0
        %v786 = vadd.f32 %v754, 1.0
        %v787 = vadd.f32 %v755, 1.0
        %v788 = vadd.f32 %v756, 1.0
        %v789 = vmul.f32 %v757, 0.5
        %v790 = vmul.f32 %v758, 0.5
        %v791 = vmul.f32 %v759, 0.5
        %v792 = vmul.f32 %v760, 0.5
        %v793 = vmul.f32 %v761, 0.5
        %v794 = vmul.f32 %v762, 0.5
        %v795 = vmul.f32 %v763, 0.5
        %v796 = vmul.f32 %v764, 0.5
        %v797 = vmul.f32 %v765, 0.5
        %v798 = vmul.f32 %v766, 0.5
        %v799 = vmul.f32 %v767, 0.5
        %v800 = vmul.f32 %v768, 0.5
        %v801 = vmul.f32 %v769, 0.5
        %v802 = vmul.f32 %v770, 0.5
        %v803 = vmul.f32 %v771, 0.5
        %v804 = vmul.f32 %v772, 0.5
        %v805 = vmul.f32 %v773, 0.5
        %v806 = vmul.f32 %v774, 0.5
        %v807 = vmul.f32 %v775, 0.5
        %v808 = vmul.f32 %v776, 0.5
        %v809 = vmul.f32 %v777, 0.5
        %v810 = vmul.f32 %v778, 0.5
        %v811 = vmul.f32 %v779, 0.5
        %v812 = vmul.f32 %v780, 0.5
        %v813 = vmul.f32 %v781, 0.5
        %v814 = vmul.f32 %v782, 0.5
        %v815 = vmul.f32 %v783, 0.5
        %v816 = vmul.f32 %v784, 0.5
        %v817 = vmul.f32 %v785, 0.5
        %v818 = vmul.f32 %v786, 0.5
        %v819 = vmul.f32 %v787, 0.5
        %v820 = vmul.f32 %v788, 0.5
        %v821 = vld [vmem:[%s5] sm:$0xff]
        %v822 = vld [vmem:[%s5 + $0x8] sm:$0xff]
        %v823 = vld [vmem:[%s5 + $0x10] sm:$0xff]
        %v824 = vld [vmem:[%s5 + $0x18] sm:$0xff]
        %v825 = vld [vmem:[%s5 + $0x20] sm:$0xff]
        %v826 = vld [vmem:[%s5 + $0x28] sm:$0xff]
        %v827 = vld [vmem:[%s5 + $0x30] sm:$0xff]
        %v828 = vld [vmem:[%s5 + $0x38] sm:$0xf]
        %830 = vset.pattern.permute.xlu0 0
        %831 = vperm.xlu0 %830, %v821
        %v832 = vpop.permute.xlu0 %831
        %835 = vset.pattern.permute.xlu0 0
        %836 = vperm.xlu0 %835, %v822
        %v837 = vpop.permute.xlu0 %836
        %840 = vset.pattern.permute.xlu0 0
        %841 = vperm.xlu0 %840, %v823
        %v842 = vpop.permute.xlu0 %841
        %845 = vset.pattern.permute.xlu0 0
        %846 = vperm.xlu0 %845, %v824
        %v847 = vpop.permute.xlu0 %846
        %850 = vset.pattern.permute.xlu0 0
        %851 = vperm.xlu0 %850, %v825
        %v852 = vpop.permute.xlu0 %851
        %855 = vset.pattern.permute.xlu0 0
        %856 = vperm.xlu0 %855, %v826
        %v857 = vpop.permute.xlu0 %856
        %860 = vset.pattern.permute.xlu0 0
        %861 = vperm.xlu0 %860, %v827
        %v862 = vpop.permute.xlu0 %861
        %865 = vset.pattern.permute.xlu0 0
        %866 = vperm.xlu0 %865, %v828
        %v867 = vpop.permute.xlu0 %866
        %v869 = vmul.f32 %v789, %v832
        %v870 = vmul.f32 %v790, %v832
        %v871 = vmul.f32 %v791, %v832
        %v872 = vmul.f32 %v792, %v832
        %v873 = vmul.f32 %v793, %v837
        %v874 = vmul.f32 %v794, %v837
        %v875 = vmul.f32 %v795, %v837
        %v876 = vmul.f32 %v796, %v837
        %v877 = vmul.f32 %v797, %v842
        %v878 = vmul.f32 %v798, %v842
        %v879 = vmul.f32 %v799, %v842
        %v880 = vmul.f32 %v800, %v842
        %v881 = vmul.f32 %v801, %v847
        %v882 = vmul.f32 %v802, %v847
        %v883 = vmul.f32 %v803, %v847
        %v884 = vmul.f32 %v804, %v847
        %v885 = vmul.f32 %v805, %v852
        %v886 = vmul.f32 %v806, %v852
        %v887 = vmul.f32 %v807, %v852
        %v888 = vmul.f32 %v808, %v852
        %v889 = vmul.f32 %v809, %v857
        %v890 = vmul.f32 %v810, %v857
        %v891 = vmul.f32 %v811, %v857
        %v892 = vmul.f32 %v812, %v857
        %v893 = vmul.f32 %v813, %v862
        %v894 = vmul.f32 %v814, %v862
        %v895 = vmul.f32 %v815, %v862
        %v896 = vmul.f32 %v816, %v862
        %v897 = vmul.f32 %v817, %v867
        %v898 = vmul.f32 %v818, %v867
        %v899 = vmul.f32 %v819, %v867
        %v900 = vmul.f32 %v820, %v867
        %v901 = vadd.f32 %v869, %v873
        %v902 = vadd.f32 %v901, %v877
        %v903 = vadd.f32 %v902, %v881
        %v904 = vadd.f32 %v903, %v885
        %v905 = vadd.f32 %v904, %v889
        %v906 = vadd.f32 %v905, %v893
        %vm907 = vcmask 1043456
        %v908 = vsel %vm907, %v897, 0.0
        %v909 = vadd.f32 %v906, %v908
        %v910 = vrot.slane %v909, 4
        %v911 = vadd.f32 %v909, %v910
        %v912 = vrot.slane %v911, 2
        %v913 = vadd.f32 %v911, %v912
        %v914 = vrot.slane %v913, 1
        %v915 = vadd.f32 %v913, %v914
        %v916 = vadd.f32 %v870, %v874
        %v917 = vadd.f32 %v916, %v878
        %v918 = vadd.f32 %v917, %v882
        %v919 = vadd.f32 %v918, %v886
        %v920 = vadd.f32 %v919, %v890
        %v921 = vadd.f32 %v920, %v894
        %v922 = vsel %vm907, %v898, 0.0
        %v923 = vadd.f32 %v921, %v922
        %v924 = vrot.slane %v923, 4
        %v925 = vadd.f32 %v923, %v924
        %v926 = vrot.slane %v925, 2
        %v927 = vadd.f32 %v925, %v926
        %v928 = vrot.slane %v927, 1
        %v929 = vadd.f32 %v927, %v928
        %v930 = vadd.f32 %v871, %v875
        %v931 = vadd.f32 %v930, %v879
        %v932 = vadd.f32 %v931, %v883
        %v933 = vadd.f32 %v932, %v887
        %v934 = vadd.f32 %v933, %v891
        %v935 = vadd.f32 %v934, %v895
        %v936 = vsel %vm907, %v899, 0.0
        %v937 = vadd.f32 %v935, %v936
        %v938 = vrot.slane %v937, 4
        %v939 = vadd.f32 %v937, %v938
        %v940 = vrot.slane %v939, 2
        %v941 = vadd.f32 %v939, %v940
        %v942 = vrot.slane %v941, 1
        %v943 = vadd.f32 %v941, %v942
        %v944 = vadd.f32 %v872, %v876
        %v945 = vadd.f32 %v944, %v880
        %v946 = vadd.f32 %v945, %v884
        %v947 = vadd.f32 %v946, %v888
        %v948 = vadd.f32 %v947, %v892
        %v949 = vadd.f32 %v948, %v896
        %v950 = vsel %vm907, %v900, 0.0
        %v951 = vadd.f32 %v949, %v950
        %v952 = vrot.slane %v951, 4
        %v953 = vadd.f32 %v951, %v952
        %v954 = vrot.slane %v953, 2
        %v955 = vadd.f32 %v953, %v954
        %v956 = vrot.slane %v955, 1
        %v957 = vadd.f32 %v955, %v956
        %v958 = vld [vmem:[#allocation2] sm:$0x1]
        %960 = vset.pattern.permute.xlu0 0
        %961 = vperm.xlu0 %960, %v958
        %v962 = vpop.permute.xlu0 %961
        %v964 = vlaneseq
        %v965 = vshrl.u32 %v964, 7
        %v966 = vsub.s32 0, %v965
        %v967 = vrot.slane %v962, %v966
        %v968 = vadd.f32 %v915, %v967
        %v969 = vadd.f32 %v929, %v967
        %v970 = vadd.f32 %v943, %v967
        %v971 = vadd.f32 %v957, %v967
        %v976 = vcombine.low %v968, %v969
        %v977 = vcombine.low %v970, %v971
        %v979 = vunpack.c.l.s4 1966171168
        %v980 = vunpack.c.0.s8 %v979
        %v981 = vlaneseq
        %v982 = vshrl.u32 %v981, 7
        %v983 = vsub.s32 %v980, %v982
        %v984 = vrot.slane %v976, %v983
        %v986 = vunpack.c.l.s4 1966171168
        %v987 = vunpack.c.0.s8 %v986
        %v988 = vlaneseq
        %v989 = vshrl.u32 %v988, 7
        %v990 = vsub.s32 %v987, %v989
        %v991 = vrot.slane %v977, %v990
        %v992 = vcombine.low %v984, %v991
        %v994 = vunpack.c.l.s4 1966171168
        %v995 = vunpack.c.0.s8 %v994
        %v996 = vlaneseq
        %v997 = vshrl.u32 %v996, 7
        %v998 = vsub.s32 %v995, %v997
        %v999 = vrot.slane %v992, %v998
        %v1001 = vlaneseq
        %vm1002 = vcmp.ge.s32.totalorder %v1001, 0
        %vm1003 = vcmp.lt.s32.totalorder %v1001, 512
        %vm1004 = vmand %vm1002, %vm1003
        %1005 = vst.msk [vmem:[%s272] sm:$0xf] %vm1004, %v999
        %s1006 = sand.u32 %s183, 1
        %s1007 = scalar_lea.sflag [#allocation4], %s1006
        %s1008 = sand.u32 %s183, 1
        %s1009 = smul.addr %s1008, 4
        %s1010 = scalar_lea.vmem [#allocation3], %s1009
        // Predicated region
        $region49: #{tpu_custom_call.1} parent=47 // pred_check
          %p1011 = pneg %p193
        $region50: #{tpu_custom_call.1} parent=47 // pred_check_branch
          %1013 = sbr.rel (%p1011) target = $region52
        $region51: #{tpu_custom_call.1} parent=47 // pred_region
          %s1014 = smul.u32 4, %s23
          %s1016 = ssub.s32 64, 64
          %1017 = vsyncadd %s1007, %s1016
          %s1018 = smul.addr %s1014, 16
          %s1019 = scalar_lea.hbm %s7, %s1018
          %s1021 = sshll.u32 %s1010, 4
          %s1022 = int_to_ptr.vmem [resolvable:$true] %s1021
          %1024 = dma.vmem_to_hbm [thread:$0]  %s1022, 64, %s1019, %s1007
        $region52: #{tpu_custom_call.1} parent=47 // pred_fallthru
          _
      $region48: #{tpu_custom_call.1} parent=5 // pred_fallthru
        _
      %p1025 = scmp.le.s32.totalorder 2, %s18
      // Predicated region
      $region53: #{tpu_custom_call.1} parent=5 // pred_check
        %p1026 = pneg %p1025
      $region54: #{tpu_custom_call.1} parent=5 // pred_check_branch
        %1028 = sbr.rel (%p1026) target = $region56
      $region55: #{tpu_custom_call.1} parent=5 // pred_region
        %s1029 = ssub.s32 %s18, 2
        // Predicated region
        $region57: #{tpu_custom_call.1} parent=55 // pred_check
          %p1030 = pneg %p199
        $region58: #{tpu_custom_call.1} parent=55 // pred_check_branch
          %1032 = sbr.rel (%p1030) target = $region60
        $region59: #{tpu_custom_call.1} parent=55 // pred_region
          %s1033 = sand.u32 %s184, 1
          %s1034 = scalar_lea.sflag [#allocation4], %s1033
          %s1035 = sand.u32 %s184, 1
          %s1036 = smul.addr %s1035, 4
          %s1037 = scalar_lea.vmem [#allocation3], %s1036
          %1038 = dma.done %s1034, 64
        $region60: #{tpu_custom_call.1} parent=55 // pred_fallthru
          _
      $region56: #{tpu_custom_call.1} parent=5 // pred_fallthru
        _
    $region6: #{tpu_custom_call.1} parent=1 // loop_footer
      %s22 = sadd.s32 1, %s18
    $region7: #{tpu_custom_call.1} parent=1 // loop_footer_branch
      %17 = sbr.rel target = $region3
    $region8: #{tpu_custom_call.1} parent=1 // loop_exit
      _
    %1039 = vsyncpa [#allocation4], 1
    %s1040 = scalar_lea.sflag [#allocation4], 1
    %1041 = vsyncpa %s1040, 1

</llo_original>
